<compile_context>
chip_gen: v7x
topology: tpu7x:2x2x1
jax: 0.10.0
libtpu: 0.0.40
codegen_flags: <defaults>
</compile_context>

<pallas_src>
import math

import jax
import jax.numpy as jnp
from jax.experimental import pallas as pl
from jax.experimental.pallas import tpu as pltpu


def _copy_kernel(x_ref, o_ref):
    # Straight lane-dense copy: identical (tile_rows, C) blocks in and out.
    o_ref[...] = x_ref[...]


def flatten(x):
    """Pallas equivalent of Flatten.forward: (N, ...) -> (N, prod(rest))."""
    n = x.shape[0]
    d = math.prod(x.shape[1:]) if x.ndim > 1 else 1
    out_shape = (n, d)
    total = n * d
    itemsize = jnp.dtype(x.dtype).itemsize

    # Pick a lane-dense flat view (rows, lane_cols) with lane_cols a multiple
    # of 128 so all loads/stores are unmasked, independent of the original D.
    lane_cols = 0
    if total % 128 == 0:
        lane_cols = 128
        while lane_cols * 2 <= 16384 and total % (lane_cols * 2) == 0:
            lane_cols *= 2
    if lane_cols == 0:
        # No lane-dense retiling possible; flatten is metadata-only anyway.
        return jnp.reshape(x, out_shape)

    rows = total // lane_cols
    flat = jnp.reshape(x, (rows, lane_cols))  # metadata-only

    # Dtype-aware sublane alignment: f32 -> 8, bf16 -> 16, int8/fp8 -> 32.
    sub = max(8, 32 // itemsize)

    # ~4 MiB per block; in+out double-buffered => ~16 MiB live VMEM.
    target_bytes = 4 * 1024 * 1024
    tile_rows = max(sub, target_bytes // (lane_cols * itemsize))
    tile_rows = (tile_rows // sub) * sub
    tile_rows = min(tile_rows, rows)
    if tile_rows < rows and rows % tile_rows != 0:
        # Prefer a sublane-aligned tile that divides rows (no masked edge).
        t = tile_rows
        while t >= sub and rows % t != 0:
            t -= sub
        if t >= sub:
            tile_rows = t
    if tile_rows < 1:
        tile_rows = rows

    grid = (pl.cdiv(rows, tile_rows),)

    y = pl.pallas_call(
        _copy_kernel,
        out_shape=jax.ShapeDtypeStruct((rows, lane_cols), x.dtype),
        grid=grid,
        in_specs=[pl.BlockSpec((tile_rows, lane_cols), lambda i: (i, 0))],
        out_specs=pl.BlockSpec((tile_rows, lane_cols), lambda i: (i, 0)),
        compiler_params=pltpu.CompilerParams(
            dimension_semantics=("parallel",),  # shard rows across TCs on v7x
            vmem_limit_bytes=32 * 1024 * 1024,  # covers v5e's 16 MiB default
        ),
        cost_estimate=pl.CostEstimate(
            flops=0, transcendentals=0, bytes_accessed=2 * total * itemsize
        ),
    )(flat)

    return jnp.reshape(y, out_shape)  # metadata-only


if __name__ == "__main__":
    key = jax.random.PRNGKey(0)
    # Small MNIST-occlusion-like input: batch=2, channels=4, spatial=16x16 (NCHW)
    x = jax.random.normal(key, (2, 4, 16, 16), dtype=jnp.float32)

    y = flatten(x)
    jax.block_until_ready(y)

    # Correctness check against plain JAX reshape (same semantics as torch .view)
    ref = x.reshape(x.shape[0], -1)
    assert y.shape == (2, 4 * 16 * 16), y.shape
    assert y.dtype == x.dtype
    assert bool(jnp.array_equal(y, ref))

    print("KERNEL_OK")
</pallas_src>

<mosaic_0001>
module attributes {stable_mosaic.version = 11 : i64} {
  func.func @_copy_kernel(%arg0: i32, %arg1: memref<1x2048xf32, #tpu.memory_space<vmem>>, %arg2: memref<1x2048xf32, #tpu.memory_space<vmem>>) attributes {dimension_semantics = [#tpu.dimension_semantics<parallel>], iteration_bounds = array<i64: 1>, scalar_prefetch = 0 : i64, scratch_operands = 0 : i64, tpu.core_type = #tpu.core_type<tc>, window_params = [{transform_indices = @transform_0, window_bounds = array<i64: 1, 2048>}, {transform_indices = @transform_1, window_bounds = array<i64: 1, 2048>}]} {
    %c0 = arith.constant 0 : index
    %c0_0 = arith.constant 0 : index
    %0 = vector.load %arg1[%c0, %c0_0] : memref<1x2048xf32, #tpu.memory_space<vmem>>, vector<1x2048xf32>
    %c0_1 = arith.constant 0 : index
    %c0_2 = arith.constant 0 : index
    %1 = vector.load %arg2[%c0_1, %c0_2] : memref<1x2048xf32, #tpu.memory_space<vmem>>, vector<1x2048xf32>
    tpu.vector_store %arg2[%c0_1, %c0_2], %0 {strides = array<i32>} : memref<1x2048xf32, #tpu.memory_space<vmem>>, vector<1x2048xf32>,
    return
  }
  func.func @transform_0(%arg0: i32) -> (i32, i32) {
    %c0_i32 = arith.constant 0 : i32
    %c0_i32_0 = arith.constant 0 : i32
    return %arg0, %c0_i32 : i32, i32
  }
  func.func @transform_1(%arg0: i32) -> (i32, i32) {
    %c0_i32 = arith.constant 0 : i32
    %c0_i32_0 = arith.constant 0 : i32
    return %arg0, %c0_i32 : i32, i32
  }
}

</mosaic_0001>

<llo_original>
// kernel: tpu_custom_call.1
$region0: #{tpu_custom_call.1}
  #allocation0 [shape = 'u32[]', space=smem, size = 0x4, offset = 0x4, fixed_abs, tag = 'smem constant byte address 0x4 - core index']
  #allocation1 [shape = 'u32[144,128]{1,0:T(1,128)}', space=vmem, size = 0x12000, scoped, tag = 'internal scratch']
  %s0 = inlined_call_operand.hbm [shape: f32[1,2048], index: 0, kind: input, shape index: {}]
  %s1 = inlined_call_operand.hbm [shape: f32[1,2048], index: 1, kind: output, shape index: {}]
  %s2 = sld [smem:[#allocation0]]
  $region18: #{tpu_custom_call.1} parent=0
    _
  %s4 = ssub.s32 1, %s2
  %s5 = scalar_select 0, %s4, %s2
  $region1: #{tpu_custom_call.1} parent=0
    #allocation2 [shape = 'u8[8192]{0}', space=vmem, size = 0x2000, scoped, tag = 'input window, operand 0, single buffered']
    #allocation3 [shape = 's32[1]{0}', space=sflag, size = 0x4, scoped, tag = 'scoped memory for tpu_custom_call.1']
    #allocation4 [shape = 's32[1]{0}', space=sflag, size = 0x4, scoped, tag = 'scoped memory for tpu_custom_call.1']
    #allocation5 [shape = 'u8[8192]{0}', space=vmem, size = 0x2000, scoped, tag = 'output window, operand 0, single buffered']
    %6 = vsyncpa [#allocation3], 0
    %7 = vsyncpa [#allocation4], 0
    // Predicated region
    $region2: #{tpu_custom_call.1} parent=1 // pred_check
      _
    $region3: #{tpu_custom_call.1} parent=1 // pred_check_branch
      %9 = sbr.rel (0) target = $region5
    $region4: #{tpu_custom_call.1} parent=1 // pred_region
      %s11 = ssub.s32 256, 256
      %12 = vsyncadd [#allocation3], %s11
      %s14 = sshll.u32 [#allocation2], 4
      %s15 = int_to_ptr.vmem [resolvable:$true] %s14
      %17 = dma.hbm_to_vmem [thread:$0]  %s0, 256, %s15, [#allocation3]
    $region5: #{tpu_custom_call.1} parent=1 // pred_fallthru
      _
    // Predicated region
    $region6: #{tpu_custom_call.1} parent=1 // pred_check
      _
    $region7: #{tpu_custom_call.1} parent=1 // pred_check_branch
      %19 = sbr.rel (0) target = $region9
    $region8: #{tpu_custom_call.1} parent=1 // pred_region
      %20 = dma.done [#allocation3], 256
    $region9: #{tpu_custom_call.1} parent=1 // pred_fallthru
      _
    %v21 = vld [vmem:[#allocation2] sm:$0xff]
    %v22 = vld [vmem:[#allocation2 + $0x8] sm:$0xff]
    %23 = vst [vmem:[#allocation5] sm:$0xff] %v21
    %24 = vst [vmem:[#allocation5 + $0x8] sm:$0xff] %v22
    // Predicated region
    $region10: #{tpu_custom_call.1} parent=1 // pred_check
      _
    $region11: #{tpu_custom_call.1} parent=1 // pred_check_branch
      %26 = sbr.rel (0) target = $region13
    $region12: #{tpu_custom_call.1} parent=1 // pred_region
      %s28 = ssub.s32 256, 256
      %29 = vsyncadd [#allocation4], %s28
      %s31 = sshll.u32 [#allocation5], 4
      %s32 = int_to_ptr.vmem [resolvable:$true] %s31
      %34 = dma.vmem_to_hbm [thread:$0]  %s32, 256, %s1, [#allocation4]
    $region13: #{tpu_custom_call.1} parent=1 // pred_fallthru
      _
    // Predicated region
    $region14: #{tpu_custom_call.1} parent=1 // pred_check
      _
    $region15: #{tpu_custom_call.1} parent=1 // pred_check_branch
      %36 = sbr.rel (0) target = $region17
    $region16: #{tpu_custom_call.1} parent=1 // pred_region
      %37 = dma.done [#allocation4], 256
    $region17: #{tpu_custom_call.1} parent=1 // pred_fallthru
      _
    %38 = vsyncpa [#allocation3], 1
    %39 = vsyncpa [#allocation4], 1

</llo_original>
